<compile_context>
chip_gen: v5e
topology: v5e:2x2
jax: 0.10.0
libtpu: 0.0.40
codegen_flags: <defaults>
</compile_context>

<pallas_src>
import jax
import jax.numpy as jnp
from jax.experimental import pallas as pl
from jax.experimental.pallas import tpu as pltpu

NEG_SLOPE = 0.01  # nn.LeakyReLU default negative slope


def _discriminator_kernel(x_ref, wa_ref, ba_ref, wb_ref, bb_ref, out_ref):
    """One row tile: (tm, E) item embeddings -> (tm, P_pad) judge logits.

    Two MXU matmuls: (tm,E)@(E,2H) -> LeakyReLU -> (tm,2H)@(2H,P_pad)."""
    x = x_ref[...]                                                     # (tm, E) bf16

    # Fused fc1 + first layers of judge_model1/judge_model2 (fold done outside).
    # TODO(synk): training-mode dropout on the fc1 output is not applied
    # (kernel matches the PyTorch module in eval mode).
    z = jnp.dot(x, wa_ref[...], preferred_element_type=jnp.float32)
    z = z + ba_ref[...]                                                # (tm, 2H) f32
    z = jnp.where(z > 0, z, NEG_SLOPE * z)                             # LeakyReLU

    # Fused second layers + branch sum: Linear(2H -> P_pad), out = judge1 + judge2.
    out = jnp.dot(z.astype(jnp.bfloat16), wb_ref[...],
                  preferred_element_type=jnp.float32) + bb_ref[...]    # (tm, P_pad) f32
    out_ref[...] = out.astype(out_ref.dtype)


def pack_discriminator_params(params):
    """One-time parameter packing (call once, reuse across forward calls).

    Folds fc1 into the fused judge first layer in f32, fuses the two judge
    branches, pads the class dim to a multiple of 128, casts weights to bf16."""
    w_fc1 = params["w_fc1"].astype(jnp.float32)                         # (E, H)
    b_fc1 = params["b_fc1"].astype(jnp.float32)                         # (1, H)

    w_a = jnp.concatenate([params["w1a"], params["w2a"]], axis=1)       # (H, 2H)
    b_a = jnp.concatenate([params["b1a"], params["b2a"]], axis=1)       # (1, 2H)
    w_b = jnp.concatenate([params["w1b"], params["w2b"]], axis=0)       # (2H, P)
    b_b = params["b1b"] + params["b2b"]                                 # (1, P)

    # Exact f32 fold of fc1 into the first fused matmul (single bf16 cast after).
    w_a_fold = w_fc1 @ w_a.astype(jnp.float32)                          # (E, 2H)
    b_a_fold = b_fc1 @ w_a.astype(jnp.float32) + b_a.astype(jnp.float32)  # (1, 2H)

    P = w_b.shape[1]
    p_pad = -(-P // 128) * 128
    w_b_p = jnp.pad(w_b.astype(jnp.float32), ((0, 0), (0, p_pad - P)))
    b_b_p = jnp.pad(b_b.astype(jnp.float32), ((0, 0), (0, p_pad - P)))

    return {
        "w_a": w_a_fold.astype(jnp.bfloat16),   # (E, 2H)
        "b_a": b_a_fold.astype(jnp.float32),    # (1, 2H)
        "w_b": w_b_p.astype(jnp.bfloat16),      # (2H, P_pad)
        "b_b": b_b_p.astype(jnp.float32),       # (1, P_pad)
        "num_product": int(P),                  # static
    }


def _num_grid_steps():
    """2 grid steps on dual-TensorCore v7x, 1 on single-TC v5e/v6e."""
    try:
        kind = str(getattr(jax.devices()[0], "device_kind", "")).lower()
        if "v7" in kind or "7x" in kind:
            return 2
    except Exception:  # pragma: no cover - detection is best-effort only
        pass
    return 1


def discriminator_forward(packed, item_embeddings1, history_record=None,
                          target_tensor=None):
    """Reproduces Discriminator.forward (history_record / target_tensor are unused
    by the PyTorch forward). Returns judge of shape (N, num_product)."""
    del history_record, target_tensor                      # unused by the module
    x = item_embeddings1
    N, E = x.shape
    H2 = packed["w_a"].shape[1]                            # 2 * hidden_size
    p_pad = packed["w_b"].shape[1]
    P = packed["num_product"]

    # Grid sizing: 1 step on single-TC chips, 2 parallel steps on v7x.
    num_steps = _num_grid_steps()
    tile_m = (((N + num_steps - 1) // num_steps) + 7) // 8 * 8
    n_pad = tile_m * num_steps

    # Cast to bf16 first, pad rows only if actually needed (static check).
    x_b = x.astype(jnp.bfloat16)
    if n_pad != N:
        x_b = jnp.pad(x_b, ((0, n_pad - N), (0, 0)))

    flops = 2 * n_pad * E * H2 + 2 * n_pad * H2 * p_pad
    bytes_accessed = (n_pad * E * 2                        # activations in (bf16)
                      + E * H2 * 2 + H2 * 4                # fused lin1 W/b
                      + H2 * p_pad * 2 + p_pad * 4         # fused lin2 W/b
                      + n_pad * p_pad * 4)                 # f32 output

    out_pad = pl.pallas_call(
        _discriminator_kernel,
        out_shape=jax.ShapeDtypeStruct((n_pad, p_pad), jnp.float32),
        grid=(num_steps,),
        in_specs=[
            pl.BlockSpec((tile_m, E), lambda i: (i, 0)),      # activation rows
            pl.BlockSpec((E, H2), lambda i: (0, 0)),          # fused (fc1 + lin1) W
            pl.BlockSpec((1, H2), lambda i: (0, 0)),          # fused (fc1 + lin1) b
            pl.BlockSpec((H2, p_pad), lambda i: (0, 0)),      # fused lin2 W
            pl.BlockSpec((1, p_pad), lambda i: (0, 0)),       # fused lin2 b
        ],
        out_specs=pl.BlockSpec((tile_m, p_pad), lambda i: (i, 0)),
        compiler_params=pltpu.CompilerParams(
            dimension_semantics=("parallel",)),
        cost_estimate=pl.CostEstimate(flops=flops, transcendentals=0,
                                      bytes_accessed=bytes_accessed),
    )(x_b, packed["w_a"], packed["b_a"], packed["w_b"], packed["b_b"])

    return out_pad[:N, :P]


if __name__ == "__main__":
    key = jax.random.PRNGKey(0)

    # config: embedding_dim = 32 -> gru_hidden_size E = 32, hidden_size H = 64,
    # num_product P = 200 (padded to 256 lanes inside the wrapper); N = 512 rows.
    E = 32
    H = 2 * E
    P = 200
    N = 512

    keys = jax.random.split(key, 11)
    params = {
        # Linear weights stored as (in, out) so the math is x @ W + b.
        "w_fc1": 0.1 * jax.random.normal(keys[0], (E, H), jnp.float32),
        "b_fc1": 0.1 * jax.random.normal(keys[1], (1, H), jnp.float32),
        "w1a": 0.1 * jax.random.normal(keys[2], (H, H), jnp.float32),
        "b1a": 0.1 * jax.random.normal(keys[3], (1, H), jnp.float32),
        "w1b": 0.1 * jax.random.normal(keys[4], (H, P), jnp.float32),
        "b1b": 0.1 * jax.random.normal(keys[5], (1, P), jnp.float32),
        "w2a": 0.1 * jax.random.normal(keys[6], (H, H), jnp.float32),
        "b2a": 0.1 * jax.random.normal(keys[7], (1, H), jnp.float32),
        "w2b": 0.1 * jax.random.normal(keys[8], (H, P), jnp.float32),
        "b2b": 0.1 * jax.random.normal(keys[9], (1, P), jnp.float32),
    }
    item_embeddings1 = jax.random.normal(keys[10], (N, E), jnp.float32)
    history_record = jnp.zeros((N, P), jnp.float32)    # unused by the forward
    target_tensor = jnp.zeros((N,), jnp.int32)         # unused by the forward

    # One-time weight packing (hoisted out of the forward path).
    packed = pack_discriminator_params(params)
    jax.block_until_ready(jax.tree_util.tree_leaves(
        {k: v for k, v in packed.items() if k != "num_product"}))

    judge = discriminator_forward(packed, item_embeddings1,
                                  history_record, target_tensor)
    jax.block_until_ready(judge)
    assert judge.shape == (N, P)

    # Pure-JAX f32 reference (loose tolerance: kernel matmuls run in bf16).
    def _ref(p, x):
        h = x @ p["w_fc1"] + p["b_fc1"]
        def branch(wa, ba, wb, bb):
            z = h @ wa + ba
            z = jnp.where(z > 0, z, NEG_SLOPE * z)
            return z @ wb + bb
        return (branch(p["w1a"], p["b1a"], p["w1b"], p["b1b"])
                + branch(p["w2a"], p["b2a"], p["w2b"], p["b2b"]))

    ref = _ref(params, item_embeddings1)
    max_err = float(jnp.max(jnp.abs(judge - ref)))
    assert max_err < 0.1, f"max abs err {max_err}"
    print("KERNEL_OK")
</pallas_src>

<mosaic_0001>
module attributes {stable_mosaic.version = 11 : i64} {
  func.func @_discriminator_kernel(%arg0: i32, %arg1: memref<512x32xbf16, #tpu.memory_space<vmem>>, %arg2: memref<32x128xbf16, #tpu.memory_space<vmem>>, %arg3: memref<1x128xf32, #tpu.memory_space<vmem>>, %arg4: memref<128x256xbf16, #tpu.memory_space<vmem>>, %arg5: memref<1x256xf32, #tpu.memory_space<vmem>>, %arg6: memref<512x256xf32, #tpu.memory_space<vmem>>) attributes {dimension_semantics = [#tpu.dimension_semantics<parallel>], iteration_bounds = array<i64: 1>, scalar_prefetch = 0 : i64, scratch_operands = 0 : i64, tpu.core_type = #tpu.core_type<tc>, window_params = [{transform_indices = @transform_0, window_bounds = array<i64: 512, 32>}, {pipeline_mode = #tpu.pipeline_mode<synchronous>, transform_indices = @transform_1, window_bounds = array<i64: 32, 128>}, {pipeline_mode = #tpu.pipeline_mode<synchronous>, transform_indices = @transform_2, window_bounds = array<i64: 1, 128>}, {pipeline_mode = #tpu.pipeline_mode<synchronous>, transform_indices = @transform_3, window_bounds = array<i64: 128, 256>}, {pipeline_mode = #tpu.pipeline_mode<synchronous>, transform_indices = @transform_4, window_bounds = array<i64: 1, 256>}, {transform_indices = @transform_5, window_bounds = array<i64: 512, 256>}]} {
    %c0 = arith.constant 0 : index
    %c0_0 = arith.constant 0 : index
    %0 = vector.load %arg1[%c0, %c0_0] : memref<512x32xbf16, #tpu.memory_space<vmem>>, vector<512x32xbf16>
    %c0_1 = arith.constant 0 : index
    %c0_2 = arith.constant 0 : index
    %1 = vector.load %arg2[%c0_1, %c0_2] : memref<32x128xbf16, #tpu.memory_space<vmem>>, vector<32x128xbf16>
    %cst = arith.constant dense<0.000000e+00> : vector<512x128xf32>
    %2 = tpu.matmul %0, %1, %cst {dimension_numbers = #tpu.dot_dimension_numbers<[1], [0], [0], [1], [0, 0, 1, 1], [], []>} : vector<512x32xbf16>, vector<32x128xbf16>, vector<512x128xf32> -> vector<512x128xf32>
    %c0_3 = arith.constant 0 : index
    %c0_4 = arith.constant 0 : index
    %3 = vector.load %arg3[%c0_3, %c0_4] : memref<1x128xf32, #tpu.memory_space<vmem>>, vector<1x128xf32>
    %4 = vector.broadcast %3 : vector<1x128xf32> to vector<512x128xf32>
    %5 = arith.addf %2, %4 : vector<512x128xf32>
    %cst_5 = arith.constant 0.000000e+00 : f32
    %6 = vector.broadcast %cst_5 : f32 to vector<512x128xf32>
    %7 = arith.cmpf ogt, %5, %6 : vector<512x128xf32>
    %cst_6 = arith.constant 0.00999999977 : f32
    %8 = vector.broadcast %cst_6 : f32 to vector<512x128xf32>
    %9 = arith.mulf %8, %5 : vector<512x128xf32>
    %10 = arith.select %7, %5, %9 : vector<512x128xi1>, vector<512x128xf32>
    %11 = arith.truncf %10 : vector<512x128xf32> to vector<512x128xbf16>
    %c0_7 = arith.constant 0 : index
    %c0_8 = arith.constant 0 : index
    %12 = vector.load %arg4[%c0_7, %c0_8] : memref<128x256xbf16, #tpu.memory_space<vmem>>, vector<128x256xbf16>
    %cst_9 = arith.constant dense<0.000000e+00> : vector<512x256xf32>
    %13 = tpu.matmul %11, %12, %cst_9 {dimension_numbers = #tpu.dot_dimension_numbers<[1], [0], [0], [1], [0, 0, 1, 1], [], []>} : vector<512x128xbf16>, vector<128x256xbf16>, vector<512x256xf32> -> vector<512x256xf32>
    %c0_10 = arith.constant 0 : index
    %c0_11 = arith.constant 0 : index
    %14 = vector.load %arg5[%c0_10, %c0_11] : memref<1x256xf32, #tpu.memory_space<vmem>>, vector<1x256xf32>
    %15 = vector.broadcast %14 : vector<1x256xf32> to vector<512x256xf32>
    %16 = arith.addf %13, %15 : vector<512x256xf32>
    %c0_12 = arith.constant 0 : index
    %c0_13 = arith.constant 0 : index
    %17 = vector.load %arg6[%c0_12, %c0_13] : memref<512x256xf32, #tpu.memory_space<vmem>>, vector<512x256xf32>
    tpu.vector_store %arg6[%c0_12, %c0_13], %16 {strides = array<i32>} : memref<512x256xf32, #tpu.memory_space<vmem>>, vector<512x256xf32>,
    return
  }
  func.func @transform_0(%arg0: i32) -> (i32, i32) {
    %c0_i32 = arith.constant 0 : i32
    %c0_i32_0 = arith.constant 0 : i32
    return %arg0, %c0_i32 : i32, i32
  }
  func.func @transform_1(%arg0: i32) -> (i32, i32) {
    %c0_i32 = arith.constant 0 : i32
    %c0_i32_0 = arith.constant 0 : i32
    %c0_i32_1 = arith.constant 0 : i32
    return %c0_i32, %c0_i32_0 : i32, i32
  }
  func.func @transform_2(%arg0: i32) -> (i32, i32) {
    %c0_i32 = arith.constant 0 : i32
    %c0_i32_0 = arith.constant 0 : i32
    %c0_i32_1 = arith.constant 0 : i32
    return %c0_i32, %c0_i32_0 : i32, i32
  }
  func.func @transform_3(%arg0: i32) -> (i32, i32) {
    %c0_i32 = arith.constant 0 : i32
    %c0_i32_0 = arith.constant 0 : i32
    %c0_i32_1 = arith.constant 0 : i32
    return %c0_i32, %c0_i32_0 : i32, i32
  }
  func.func @transform_4(%arg0: i32) -> (i32, i32) {
    %c0_i32 = arith.constant 0 : i32
    %c0_i32_0 = arith.constant 0 : i32
    %c0_i32_1 = arith.constant 0 : i32
    return %c0_i32, %c0_i32_0 : i32, i32
  }
  func.func @transform_5(%arg0: i32) -> (i32, i32) {
    %c0_i32 = arith.constant 0 : i32
    %c0_i32_0 = arith.constant 0 : i32
    return %arg0, %c0_i32 : i32, i32
  }
}

</mosaic_0001>

<llo_original>
// kernel: tpu_custom_call.1
$region0: #{tpu_custom_call.1}
  #allocation0 [shape = 'u32[]', space=smem, size = 0x4, offset = 0x4, fixed_abs, tag = 'smem constant byte address 0x4 - core index']
  #allocation1 [shape = 'u32[72,128]{1,0:T(1,128)}', space=vmem, size = 0x9000, scoped, tag = 'internal scratch']
  %s0 = inlined_call_operand.vmem [shape: bf16[512,32], index: 0, kind: input, shape index: {}]
  %s1 = inlined_call_operand.vmem [shape: bf16[32,128], index: 1, kind: input, shape index: {}]
  %s2 = inlined_call_operand.vmem [shape: f32[1,128], index: 2, kind: input, shape index: {}]
  %s3 = inlined_call_operand.vmem [shape: bf16[128,256], index: 3, kind: input, shape index: {}]
  %s4 = inlined_call_operand.vmem [shape: f32[1,256], index: 4, kind: input, shape index: {}]
  %s5 = inlined_call_operand.hbm [shape: f32[512,256], index: 5, kind: output, shape index: {}]
  %s6 = sld [smem:[#allocation0]]
  $region30: #{tpu_custom_call.1} parent=0
    _
  %s8 = ssub.s32 1, %s6
  %s9 = scalar_select 0, %s8, %s6
  $region1: #{tpu_custom_call.1} parent=0
    #allocation2 [shape = 'u8[524288]{0}', space=vmem, size = 0x80000, scoped, tag = 'output window, operand 0, single buffered']
    #allocation3 [shape = 's32[1]{0}', space=sflag, size = 0x4, scoped, tag = 'scoped memory for tpu_custom_call.1']
    %10 = vsyncpa [#allocation3], 0
    // Predicated region
    $region2: #{tpu_custom_call.1} parent=1 // pred_check
      _
    $region3: #{tpu_custom_call.1} parent=1 // pred_check_branch
      %12 = sbr.rel (0) target = $region5
    $region4: #{tpu_custom_call.1} parent=1 // pred_region
      _
    $region5: #{tpu_custom_call.1} parent=1 // pred_fallthru
      _
    // Predicated region
    $region6: #{tpu_custom_call.1} parent=1 // pred_check
      _
    $region7: #{tpu_custom_call.1} parent=1 // pred_check_branch
      %14 = sbr.rel (0) target = $region9
    $region8: #{tpu_custom_call.1} parent=1 // pred_region
      _
    $region9: #{tpu_custom_call.1} parent=1 // pred_fallthru
      _
    // Predicated region
    $region10: #{tpu_custom_call.1} parent=1 // pred_check
      _
    $region11: #{tpu_custom_call.1} parent=1 // pred_check_branch
      %16 = sbr.rel (0) target = $region13
    $region12: #{tpu_custom_call.1} parent=1 // pred_region
      _
    $region13: #{tpu_custom_call.1} parent=1 // pred_fallthru
      _
    // Predicated region
    $region14: #{tpu_custom_call.1} parent=1 // pred_check
      _
    $region15: #{tpu_custom_call.1} parent=1 // pred_check_branch
      %18 = sbr.rel (0) target = $region17
    $region16: #{tpu_custom_call.1} parent=1 // pred_region
      _
    $region17: #{tpu_custom_call.1} parent=1 // pred_fallthru
      _
    // Predicated region
    $region18: #{tpu_custom_call.1} parent=1 // pred_check
      _
    $region19: #{tpu_custom_call.1} parent=1 // pred_check_branch
      %20 = sbr.rel (0) target = $region21
    $region20: #{tpu_custom_call.1} parent=1 // pred_region
      _
    $region21: #{tpu_custom_call.1} parent=1 // pred_fallthru
      _
    %v22 = vld [vmem:[%s0] sm:$0xf]
    %v23 = vld [vmem:[%s0 + $0x4] sm:$0xf]
    %v24 = vld [vmem:[%s0 + $0x8] sm:$0xf]
    %v25 = vld [vmem:[%s0 + $0xc] sm:$0xf]
    %v26 = vld [vmem:[%s0 + $0x10] sm:$0xf]
    %v27 = vld [vmem:[%s0 + $0x14] sm:$0xf]
    %v28 = vld [vmem:[%s0 + $0x18] sm:$0xf]
    %v29 = vld [vmem:[%s0 + $0x1c] sm:$0xf]
    %v30 = vld [vmem:[%s0 + $0x20] sm:$0xf]
    %v31 = vld [vmem:[%s0 + $0x24] sm:$0xf]
    %v32 = vld [vmem:[%s0 + $0x28] sm:$0xf]
    %v33 = vld [vmem:[%s0 + $0x2c] sm:$0xf]
    %v34 = vld [vmem:[%s0 + $0x30] sm:$0xf]
    %v35 = vld [vmem:[%s0 + $0x34] sm:$0xf]
    %v36 = vld [vmem:[%s0 + $0x38] sm:$0xf]
    %v37 = vld [vmem:[%s0 + $0x3c] sm:$0xf]
    %v38 = vld [vmem:[%s0 + $0x40] sm:$0xf]
    %v39 = vld [vmem:[%s0 + $0x44] sm:$0xf]
    %v40 = vld [vmem:[%s0 + $0x48] sm:$0xf]
    %v41 = vld [vmem:[%s0 + $0x4c] sm:$0xf]
    %v42 = vld [vmem:[%s0 + $0x50] sm:$0xf]
    %v43 = vld [vmem:[%s0 + $0x54] sm:$0xf]
    %v44 = vld [vmem:[%s0 + $0x58] sm:$0xf]
    %v45 = vld [vmem:[%s0 + $0x5c] sm:$0xf]
    %v46 = vld [vmem:[%s0 + $0x60] sm:$0xf]
    %v47 = vld [vmem:[%s0 + $0x64] sm:$0xf]
    %v48 = vld [vmem:[%s0 + $0x68] sm:$0xf]
    %v49 = vld [vmem:[%s0 + $0x6c] sm:$0xf]
    %v50 = vld [vmem:[%s0 + $0x70] sm:$0xf]
    %v51 = vld [vmem:[%s0 + $0x74] sm:$0xf]
    %v52 = vld [vmem:[%s0 + $0x78] sm:$0xf]
    %v53 = vld [vmem:[%s0 + $0x7c] sm:$0xf]
    %v54 = vld [vmem:[%s0 + $0x80] sm:$0xf]
    %v55 = vld [vmem:[%s0 + $0x84] sm:$0xf]
    %v56 = vld [vmem:[%s0 + $0x88] sm:$0xf]
    %v57 = vld [vmem:[%s0 + $0x8c] sm:$0xf]
    %v58 = vld [vmem:[%s0 + $0x90] sm:$0xf]
    %v59 = vld [vmem:[%s0 + $0x94] sm:$0xf]
    %v60 = vld [vmem:[%s0 + $0x98] sm:$0xf]
    %v61 = vld [vmem:[%s0 + $0x9c] sm:$0xf]
    %v62 = vld [vmem:[%s0 + $0xa0] sm:$0xf]
    %v63 = vld [vmem:[%s0 + $0xa4] sm:$0xf]
    %v64 = vld [vmem:[%s0 + $0xa8] sm:$0xf]
    %v65 = vld [vmem:[%s0 + $0xac] sm:$0xf]
    %v66 = vld [vmem:[%s0 + $0xb0] sm:$0xf]
    %v67 = vld [vmem:[%s0 + $0xb4] sm:$0xf]
    %v68 = vld [vmem:[%s0 + $0xb8] sm:$0xf]
    %v69 = vld [vmem:[%s0 + $0xbc] sm:$0xf]
    %v70 = vld [vmem:[%s0 + $0xc0] sm:$0xf]
    %v71 = vld [vmem:[%s0 + $0xc4] sm:$0xf]
    %v72 = vld [vmem:[%s0 + $0xc8] sm:$0xf]
    %v73 = vld [vmem:[%s0 + $0xcc] sm:$0xf]
    %v74 = vld [vmem:[%s0 + $0xd0] sm:$0xf]
    %v75 = vld [vmem:[%s0 + $0xd4] sm:$0xf]
    %v76 = vld [vmem:[%s0 + $0xd8] sm:$0xf]
    %v77 = vld [vmem:[%s0 + $0xdc] sm:$0xf]
    %v78 = vld [vmem:[%s0 + $0xe0] sm:$0xf]
    %v79 = vld [vmem:[%s0 + $0xe4] sm:$0xf]
    %v80 = vld [vmem:[%s0 + $0xe8] sm:$0xf]
    %v81 = vld [vmem:[%s0 + $0xec] sm:$0xf]
    %v82 = vld [vmem:[%s0 + $0xf0] sm:$0xf]
    %v83 = vld [vmem:[%s0 + $0xf4] sm:$0xf]
    %v84 = vld [vmem:[%s0 + $0xf8] sm:$0xf]
    %v85 = vld [vmem:[%s0 + $0xfc] sm:$0xf]
    %v86 = vld [vmem:[%s1] sm:$0xf]
    %v87 = vld [vmem:[%s1 + $0x4] sm:$0xf]
    %v88 = vld [vmem:[%s1 + $0x8] sm:$0xf]
    %v89 = vld [vmem:[%s1 + $0xc] sm:$0xf]
    %v90 = vld [vmem:[%s2] sm:$0x1]
    %v92 = vperm.slane %v90, 0
    %v158 = vunpack.c.l.b16 %v22
    %v159 = vunpack.c.l.b16 %v23
    %v160 = vunpack.c.l.b16 %v24
    %v161 = vunpack.c.l.b16 %v25
    %v162 = vunpack.c.l.b16 %v26
    %v163 = vunpack.c.l.b16 %v27
    %v164 = vunpack.c.l.b16 %v28
    %v165 = vunpack.c.l.b16 %v29
    %v166 = vunpack.c.l.b16 %v30
    %v167 = vunpack.c.l.b16 %v31
    %v168 = vunpack.c.l.b16 %v32
    %v169 = vunpack.c.l.b16 %v33
    %v170 = vunpack.c.l.b16 %v34
    %v171 = vunpack.c.l.b16 %v35
    %v172 = vunpack.c.l.b16 %v36
    %v173 = vunpack.c.l.b16 %v37
    %v174 = vunpack.c.l.b16 %v38
    %v175 = vunpack.c.l.b16 %v39
    %v176 = vunpack.c.l.b16 %v40
    %v177 = vunpack.c.l.b16 %v41
    %v178 = vunpack.c.l.b16 %v42
    %v179 = vunpack.c.l.b16 %v43
    %v180 = vunpack.c.l.b16 %v44
    %v181 = vunpack.c.l.b16 %v45
    %v182 = vunpack.c.l.b16 %v46
    %v183 = vunpack.c.l.b16 %v47
    %v184 = vunpack.c.l.b16 %v48
    %v185 = vunpack.c.l.b16 %v49
    %v186 = vunpack.c.l.b16 %v50
    %v187 = vunpack.c.l.b16 %v51
    %v188 = vunpack.c.l.b16 %v52
    %v189 = vunpack.c.l.b16 %v53
    %v190 = vunpack.c.l.b16 %v54
    %v191 = vunpack.c.l.b16 %v55
    %v192 = vunpack.c.l.b16 %v56
    %v193 = vunpack.c.l.b16 %v57
    %v194 = vunpack.c.l.b16 %v58
    %v195 = vunpack.c.l.b16 %v59
    %v196 = vunpack.c.l.b16 %v60
    %v197 = vunpack.c.l.b16 %v61
    %v198 = vunpack.c.l.b16 %v62
    %v199 = vunpack.c.l.b16 %v63
    %v200 = vunpack.c.l.b16 %v64
    %v201 = vunpack.c.l.b16 %v65
    %v202 = vunpack.c.l.b16 %v66
    %v203 = vunpack.c.l.b16 %v67
    %v204 = vunpack.c.l.b16 %v68
    %v205 = vunpack.c.l.b16 %v69
    %v206 = vunpack.c.l.b16 %v70
    %v207 = vunpack.c.l.b16 %v71
    %v208 = vunpack.c.l.b16 %v72
    %v209 = vunpack.c.l.b16 %v73
    %v210 = vunpack.c.l.b16 %v74
    %v211 = vunpack.c.l.b16 %v75
    %v212 = vunpack.c.l.b16 %v76
    %v213 = vunpack.c.l.b16 %v77
    %v214 = vunpack.c.l.b16 %v78
    %v215 = vunpack.c.l.b16 %v79
    %v216 = vunpack.c.l.b16 %v80
    %v217 = vunpack.c.l.b16 %v81
    %v218 = vunpack.c.l.b16 %v82
    %v219 = vunpack.c.l.b16 %v83
    %v220 = vunpack.c.l.b16 %v84
    %v221 = vunpack.c.l.b16 %v85
    %v222 = vpack.c.b16 %v159, %v158
    %v223 = vpack.c.b16 %v161, %v160
    %v224 = vpack.c.b16 %v163, %v162
    %v225 = vpack.c.b16 %v165, %v164
    %v226 = vpack.c.b16 %v167, %v166
    %v227 = vpack.c.b16 %v169, %v168
    %v228 = vpack.c.b16 %v171, %v170
    %v229 = vpack.c.b16 %v173, %v172
    %v230 = vpack.c.b16 %v175, %v174
    %v231 = vpack.c.b16 %v177, %v176
    %v232 = vpack.c.b16 %v179, %v178
    %v233 = vpack.c.b16 %v181, %v180
    %v234 = vpack.c.b16 %v183, %v182
    %v235 = vpack.c.b16 %v185, %v184
    %v236 = vpack.c.b16 %v187, %v186
    %v237 = vpack.c.b16 %v189, %v188
    %v238 = vpack.c.b16 %v191, %v190
    %v239 = vpack.c.b16 %v193, %v192
    %v240 = vpack.c.b16 %v195, %v194
    %v241 = vpack.c.b16 %v197, %v196
    %v242 = vpack.c.b16 %v199, %v198
    %v243 = vpack.c.b16 %v201, %v200
    %v244 = vpack.c.b16 %v203, %v202
    %v245 = vpack.c.b16 %v205, %v204
    %v246 = vpack.c.b16 %v207, %v206
    %v247 = vpack.c.b16 %v209, %v208
    %v248 = vpack.c.b16 %v211, %v210
    %v249 = vpack.c.b16 %v213, %v212
    %v250 = vpack.c.b16 %v215, %v214
    %v251 = vpack.c.b16 %v217, %v216
    %v252 = vpack.c.b16 %v219, %v218
    %v253 = vpack.c.b16 %v221, %v220
    %v258 = vunpack.c.l.b16 %v86
    %v259 = vunpack.c.l.b16 %v87
    %v260 = vunpack.c.l.b16 %v88
    %v261 = vunpack.c.l.b16 %v89
    %v262 = vpack.c.b16 %v259, %v258
    %v263 = vpack.c.b16 %v261, %v260
    %vm266 = vcmask 261120
    %v268 = vsel %vm266, %v222, 0
    %v271 = vsel %vm266, %v223, 0
    %v274 = vsel %vm266, %v224, 0
    %v277 = vsel %vm266, %v225, 0
    %v280 = vsel %vm266, %v226, 0
    %v283 = vsel %vm266, %v227, 0
    %v286 = vsel %vm266, %v228, 0
    %v289 = vsel %vm266, %v229, 0
    %v292 = vsel %vm266, %v230, 0
    %v295 = vsel %vm266, %v231, 0
    %v298 = vsel %vm266, %v232, 0
    %v301 = vsel %vm266, %v233, 0
    %v304 = vsel %vm266, %v234, 0
    %v307 = vsel %vm266, %v235, 0
    %v310 = vsel %vm266, %v236, 0
    %v313 = vsel %vm266, %v237, 0
    %v316 = vsel %vm266, %v238, 0
    %v319 = vsel %vm266, %v239, 0
    %v322 = vsel %vm266, %v240, 0
    %v325 = vsel %vm266, %v241, 0
    %v328 = vsel %vm266, %v242, 0
    %v331 = vsel %vm266, %v243, 0
    %v334 = vsel %vm266, %v244, 0
    %v337 = vsel %vm266, %v245, 0
    %v340 = vsel %vm266, %v246, 0
    %v343 = vsel %vm266, %v247, 0
    %v346 = vsel %vm266, %v248, 0
    %v349 = vsel %vm266, %v249, 0
    %v352 = vsel %vm266, %v250, 0
    %v355 = vsel %vm266, %v251, 0
    %v358 = vsel %vm266, %v252, 0
    %v361 = vsel %vm266, %v253, 0
    %363 = vmatpush.bf16.msra.mxu0 0
    %364 = vmatpush.bf16.msra.mxu0 0
    %365 = vmatpush.bf16.msra.mxu0 0
    %366 = vmatpush.bf16.msra.mxu0 0
    %367 = vmatpush.bf16.msra.mxu0 0
    %368 = vmatpush.bf16.msra.mxu0 0
    %369 = vmatpush.bf16.msra.mxu0 %v263
    %370 = vmatpush.bf16.msra.mxu0 %v262
    %371 = vmatmul.bf16.gmra.mxu0 %v268
    %v372 = vpop.f32.mrf.mxu0
    %v373 = vadd.f32 %v92, %v372
    %v374 = vpop.f32.mrf.mxu0
    %v375 = vadd.f32 %v92, %v374
    %376 = vmatmul.bf16.gmra.mxu0 %v271
    %v377 = vpop.f32.mrf.mxu0
    %v378 = vadd.f32 %v92, %v377
    %v379 = vpop.f32.mrf.mxu0
    %v380 = vadd.f32 %v92, %v379
    %381 = vmatmul.bf16.gmra.mxu0 %v274
    %v382 = vpop.f32.mrf.mxu0
    %v383 = vadd.f32 %v92, %v382
    %v384 = vpop.f32.mrf.mxu0
    %v385 = vadd.f32 %v92, %v384
    %386 = vmatmul.bf16.gmra.mxu0 %v277
    %v387 = vpop.f32.mrf.mxu0
    %v388 = vadd.f32 %v92, %v387
    %v389 = vpop.f32.mrf.mxu0
    %v390 = vadd.f32 %v92, %v389
    %391 = vmatmul.bf16.gmra.mxu0 %v280
    %v392 = vpop.f32.mrf.mxu0
    %v393 = vadd.f32 %v92, %v392
    %v394 = vpop.f32.mrf.mxu0
    %v395 = vadd.f32 %v92, %v394
    %396 = vmatmul.bf16.gmra.mxu0 %v283
    %v397 = vpop.f32.mrf.mxu0
    %v398 = vadd.f32 %v92, %v397
    %v399 = vpop.f32.mrf.mxu0
    %v400 = vadd.f32 %v92, %v399
    %401 = vmatmul.bf16.gmra.mxu0 %v286
    %v402 = vpop.f32.mrf.mxu0
    %v403 = vadd.f32 %v92, %v402
    %v404 = vpop.f32.mrf.mxu0
    %v405 = vadd.f32 %v92, %v404
    %406 = vmatmul.bf16.gmra.mxu0 %v289
    %v407 = vpop.f32.mrf.mxu0
    %v408 = vadd.f32 %v92, %v407
    %v409 = vpop.f32.mrf.mxu0
    %v410 = vadd.f32 %v92, %v409
    %411 = vmatmul.bf16.gmra.mxu0 %v292
    %v412 = vpop.f32.mrf.mxu0
    %v413 = vadd.f32 %v92, %v412
    %v414 = vpop.f32.mrf.mxu0
    %v415 = vadd.f32 %v92, %v414
    %416 = vmatmul.bf16.gmra.mxu0 %v295
    %v417 = vpop.f32.mrf.mxu0
    %v418 = vadd.f32 %v92, %v417
    %v419 = vpop.f32.mrf.mxu0
    %v420 = vadd.f32 %v92, %v419
    %421 = vmatmul.bf16.gmra.mxu0 %v298
    %v422 = vpop.f32.mrf.mxu0
    %v423 = vadd.f32 %v92, %v422
    %v424 = vpop.f32.mrf.mxu0
    %v425 = vadd.f32 %v92, %v424
    %426 = vmatmul.bf16.gmra.mxu0 %v301
    %v427 = vpop.f32.mrf.mxu0
    %v428 = vadd.f32 %v92, %v427
    %v429 = vpop.f32.mrf.mxu0
    %v430 = vadd.f32 %v92, %v429
    %431 = vmatmul.bf16.gmra.mxu0 %v304
    %v432 = vpop.f32.mrf.mxu0
    %v433 = vadd.f32 %v92, %v432
    %v434 = vpop.f32.mrf.mxu0
    %v435 = vadd.f32 %v92, %v434
    %436 = vmatmul.bf16.gmra.mxu0 %v307
    %v437 = vpop.f32.mrf.mxu0
    %v438 = vadd.f32 %v92, %v437
    %v439 = vpop.f32.mrf.mxu0
    %v440 = vadd.f32 %v92, %v439
    %441 = vmatmul.bf16.gmra.mxu0 %v310
    %v442 = vpop.f32.mrf.mxu0
    %v443 = vadd.f32 %v92, %v442
    %v444 = vpop.f32.mrf.mxu0
    %v445 = vadd.f32 %v92, %v444
    %446 = vmatmul.bf16.gmra.mxu0 %v313
    %v447 = vpop.f32.mrf.mxu0
    %v448 = vadd.f32 %v92, %v447
    %v449 = vpop.f32.mrf.mxu0
    %v450 = vadd.f32 %v92, %v449
    %451 = vmatmul.bf16.gmra.mxu0 %v316
    %v452 = vpop.f32.mrf.mxu0
    %v453 = vadd.f32 %v92, %v452
    %v454 = vpop.f32.mrf.mxu0
    %v455 = vadd.f32 %v92, %v454
    %456 = vmatmul.bf16.gmra.mxu0 %v319
    %v457 = vpop.f32.mrf.mxu0
    %v458 = vadd.f32 %v92, %v457
    %v459 = vpop.f32.mrf.mxu0
    %v460 = vadd.f32 %v92, %v459
    %461 = vmatmul.bf16.gmra.mxu0 %v322
    %v462 = vpop.f32.mrf.mxu0
    %v463 = vadd.f32 %v92, %v462
    %v464 = vpop.f32.mrf.mxu0
    %v465 = vadd.f32 %v92, %v464
    %466 = vmatmul.bf16.gmra.mxu0 %v325
    %v467 = vpop.f32.mrf.mxu0
    %v468 = vadd.f32 %v92, %v467
    %v469 = vpop.f32.mrf.mxu0
    %v470 = vadd.f32 %v92, %v469
    %471 = vmatmul.bf16.gmra.mxu0 %v328
    %v472 = vpop.f32.mrf.mxu0
    %v473 = vadd.f32 %v92, %v472
    %v474 = vpop.f32.mrf.mxu0
    %v475 = vadd.f32 %v92, %v474
    %476 = vmatmul.bf16.gmra.mxu0 %v331
    %v477 = vpop.f32.mrf.mxu0
    %v478 = vadd.f32 %v92, %v477
    %v479 = vpop.f32.mrf.mxu0
    %v480 = vadd.f32 %v92, %v479
    %481 = vmatmul.bf16.gmra.mxu0 %v334
    %v482 = vpop.f32.mrf.mxu0
    %v483 = vadd.f32 %v92, %v482
    %v484 = vpop.f32.mrf.mxu0
    %v485 = vadd.f32 %v92, %v484
    %486 = vmatmul.bf16.gmra.mxu0 %v337
    %v487 = vpop.f32.mrf.mxu0
    %v488 = vadd.f32 %v92, %v487
    %v489 = vpop.f32.mrf.mxu0
    %v490 = vadd.f32 %v92, %v489
    %491 = vmatmul.bf16.gmra.mxu0 %v340
    %v492 = vpop.f32.mrf.mxu0
    %v493 = vadd.f32 %v92, %v492
    %v494 = vpop.f32.mrf.mxu0
    %v495 = vadd.f32 %v92, %v494
    %496 = vmatmul.bf16.gmra.mxu0 %v343
    %v497 = vpop.f32.mrf.mxu0
    %v498 = vadd.f32 %v92, %v497
    %v499 = vpop.f32.mrf.mxu0
    %v500 = vadd.f32 %v92, %v499
    %501 = vmatmul.bf16.gmra.mxu0 %v346
    %v502 = vpop.f32.mrf.mxu0
    %v503 = vadd.f32 %v92, %v502
    %v504 = vpop.f32.mrf.mxu0
    %v505 = vadd.f32 %v92, %v504
    %506 = vmatmul.bf16.gmra.mxu0 %v349
    %v507 = vpop.f32.mrf.mxu0
    %v508 = vadd.f32 %v92, %v507
    %v509 = vpop.f32.mrf.mxu0
    %v510 = vadd.f32 %v92, %v509
    %511 = vmatmul.bf16.gmra.mxu0 %v352
    %v512 = vpop.f32.mrf.mxu0
    %v513 = vadd.f32 %v92, %v512
    %v514 = vpop.f32.mrf.mxu0
    %v515 = vadd.f32 %v92, %v514
    %516 = vmatmul.bf16.gmra.mxu0 %v355
    %v517 = vpop.f32.mrf.mxu0
    %v518 = vadd.f32 %v92, %v517
    %v519 = vpop.f32.mrf.mxu0
    %v520 = vadd.f32 %v92, %v519
    %521 = vmatmul.bf16.gmra.mxu0 %v358
    %v522 = vpop.f32.mrf.mxu0
    %v523 = vadd.f32 %v92, %v522
    %v524 = vpop.f32.mrf.mxu0
    %v525 = vadd.f32 %v92, %v524
    %526 = vmatmul.bf16.gmra.mxu0 %v361
    %v527 = vpop.f32.mrf.mxu0
    %v528 = vadd.f32 %v92, %v527
    %v529 = vpop.f32.mrf.mxu0
    %v530 = vadd.f32 %v92, %v529
    %531 = vdwg.mxu0
    %vm532 = vcmp.gt.f32.partialorder %v373, 0.0
    %vm533 = vcmp.gt.f32.partialorder %v375, 0.0
    %vm534 = vcmp.gt.f32.partialorder %v378, 0.0
    %vm535 = vcmp.gt.f32.partialorder %v380, 0.0
    %vm536 = vcmp.gt.f32.partialorder %v383, 0.0
    %vm537 = vcmp.gt.f32.partialorder %v385, 0.0
    %vm538 = vcmp.gt.f32.partialorder %v388, 0.0
    %vm539 = vcmp.gt.f32.partialorder %v390, 0.0
    %vm540 = vcmp.gt.f32.partialorder %v393, 0.0
    %vm541 = vcmp.gt.f32.partialorder %v395, 0.0
    %vm542 = vcmp.gt.f32.partialorder %v398, 0.0
    %vm543 = vcmp.gt.f32.partialorder %v400, 0.0
    %vm544 = vcmp.gt.f32.partialorder %v403, 0.0
    %vm545 = vcmp.gt.f32.partialorder %v405, 0.0
    %vm546 = vcmp.gt.f32.partialorder %v408, 0.0
    %vm547 = vcmp.gt.f32.partialorder %v410, 0.0
    %vm548 = vcmp.gt.f32.partialorder %v413, 0.0
    %vm549 = vcmp.gt.f32.partialorder %v415, 0.0
    %vm550 = vcmp.gt.f32.partialorder %v418, 0.0
    %vm551 = vcmp.gt.f32.partialorder %v420, 0.0
    %vm552 = vcmp.gt.f32.partialorder %v423, 0.0
    %vm553 = vcmp.gt.f32.partialorder %v425, 0.0
    %vm554 = vcmp.gt.f32.partialorder %v428, 0.0
    %vm555 = vcmp.gt.f32.partialorder %v430, 0.0
    %vm556 = vcmp.gt.f32.partialorder %v433, 0.0
    %vm557 = vcmp.gt.f32.partialorder %v435, 0.0
    %vm558 = vcmp.gt.f32.partialorder %v438, 0.0
    %vm559 = vcmp.gt.f32.partialorder %v440, 0.0
    %vm560 = vcmp.gt.f32.partialorder %v443, 0.0
    %vm561 = vcmp.gt.f32.partialorder %v445, 0.0
    %vm562 = vcmp.gt.f32.partialorder %v448, 0.0
    %vm563 = vcmp.gt.f32.partialorder %v450, 0.0
    %vm564 = vcmp.gt.f32.partialorder %v453, 0.0
    %vm565 = vcmp.gt.f32.partialorder %v455, 0.0
    %vm566 = vcmp.gt.f32.partialorder %v458, 0.0
    %vm567 = vcmp.gt.f32.partialorder %v460, 0.0
    %vm568 = vcmp.gt.f32.partialorder %v463, 0.0
    %vm569 = vcmp.gt.f32.partialorder %v465, 0.0
    %vm570 = vcmp.gt.f32.partialorder %v468, 0.0
    %vm571 = vcmp.gt.f32.partialorder %v470, 0.0
    %vm572 = vcmp.gt.f32.partialorder %v473, 0.0
    %vm573 = vcmp.gt.f32.partialorder %v475, 0.0
    %vm574 = vcmp.gt.f32.partialorder %v478, 0.0
    %vm575 = vcmp.gt.f32.partialorder %v480, 0.0
    %vm576 = vcmp.gt.f32.partialorder %v483, 0.0
    %vm577 = vcmp.gt.f32.partialorder %v485, 0.0
    %vm578 = vcmp.gt.f32.partialorder %v488, 0.0
    %vm579 = vcmp.gt.f32.partialorder %v490, 0.0
    %vm580 = vcmp.gt.f32.partialorder %v493, 0.0
    %vm581 = vcmp.gt.f32.partialorder %v495, 0.0
    %vm582 = vcmp.gt.f32.partialorder %v498, 0.0
    %vm583 = vcmp.gt.f32.partialorder %v500, 0.0
    %vm584 = vcmp.gt.f32.partialorder %v503, 0.0
    %vm585 = vcmp.gt.f32.partialorder %v505, 0.0
    %vm586 = vcmp.gt.f32.partialorder %v508, 0.0
    %vm587 = vcmp.gt.f32.partialorder %v510, 0.0
    %vm588 = vcmp.gt.f32.partialorder %v513, 0.0
    %vm589 = vcmp.gt.f32.partialorder %v515, 0.0
    %vm590 = vcmp.gt.f32.partialorder %v518, 0.0
    %vm591 = vcmp.gt.f32.partialorder %v520, 0.0
    %vm592 = vcmp.gt.f32.partialorder %v523, 0.0
    %vm593 = vcmp.gt.f32.partialorder %v525, 0.0
    %vm594 = vcmp.gt.f32.partialorder %v528, 0.0
    %vm595 = vcmp.gt.f32.partialorder %v530, 0.0
    %v596 = vmul.f32 %v373, 0.01
    %v597 = vmul.f32 %v375, 0.01
    %v598 = vmul.f32 %v378, 0.01
    %v599 = vmul.f32 %v380, 0.01
    %v600 = vmul.f32 %v383, 0.01
    %v601 = vmul.f32 %v385, 0.01
    %v602 = vmul.f32 %v388, 0.01
    %v603 = vmul.f32 %v390, 0.01
    %v604 = vmul.f32 %v393, 0.01
    %v605 = vmul.f32 %v395, 0.01
    %v606 = vmul.f32 %v398, 0.01
    %v607 = vmul.f32 %v400, 0.01
    %v608 = vmul.f32 %v403, 0.01
    %v609 = vmul.f32 %v405, 0.01
    %v610 = vmul.f32 %v408, 0.01
    %v611 = vmul.f32 %v410, 0.01
    %v612 = vmul.f32 %v413, 0.01
    %v613 = vmul.f32 %v415, 0.01
    %v614 = vmul.f32 %v418, 0.01
    %v615 = vmul.f32 %v420, 0.01
    %v616 = vmul.f32 %v423, 0.01
    %v617 = vmul.f32 %v425, 0.01
    %v618 = vmul.f32 %v428, 0.01
    %v619 = vmul.f32 %v430, 0.01
    %v620 = vmul.f32 %v433, 0.01
    %v621 = vmul.f32 %v435, 0.01
    %v622 = vmul.f32 %v438, 0.01
    %v623 = vmul.f32 %v440, 0.01
    %v624 = vmul.f32 %v443, 0.01
    %v625 = vmul.f32 %v445, 0.01
    %v626 = vmul.f32 %v448, 0.01
    %v627 = vmul.f32 %v450, 0.01
    %v628 = vmul.f32 %v453, 0.01
    %v629 = vmul.f32 %v455, 0.01
    %v630 = vmul.f32 %v458, 0.01
    %v631 = vmul.f32 %v460, 0.01
    %v632 = vmul.f32 %v463, 0.01
    %v633 = vmul.f32 %v465, 0.01
    %v634 = vmul.f32 %v468, 0.01
    %v635 = vmul.f32 %v470, 0.01
    %v636 = vmul.f32 %v473, 0.01
    %v637 = vmul.f32 %v475, 0.01
    %v638 = vmul.f32 %v478, 0.01
    %v639 = vmul.f32 %v480, 0.01
    %v640 = vmul.f32 %v483, 0.01
    %v641 = vmul.f32 %v485, 0.01
    %v642 = vmul.f32 %v488, 0.01
    %v643 = vmul.f32 %v490, 0.01
    %v644 = vmul.f32 %v493, 0.01
    %v645 = vmul.f32 %v495, 0.01
    %v646 = vmul.f32 %v498, 0.01
    %v647 = vmul.f32 %v500, 0.01
    %v648 = vmul.f32 %v503, 0.01
    %v649 = vmul.f32 %v505, 0.01
    %v650 = vmul.f32 %v508, 0.01
    %v651 = vmul.f32 %v510, 0.01
    %v652 = vmul.f32 %v513, 0.01
    %v653 = vmul.f32 %v515, 0.01
    %v654 = vmul.f32 %v518, 0.01
    %v655 = vmul.f32 %v520, 0.01
    %v656 = vmul.f32 %v523, 0.01
    %v657 = vmul.f32 %v525, 0.01
    %v658 = vmul.f32 %v528, 0.01
    %v659 = vmul.f32 %v530, 0.01
    %v660 = vsel %vm532, %v373, %v596
    %v661 = vsel %vm533, %v375, %v597
    %v662 = vsel %vm534, %v378, %v598
    %v663 = vsel %vm535, %v380, %v599
    %v664 = vsel %vm536, %v383, %v600
    %v665 = vsel %vm537, %v385, %v601
    %v666 = vsel %vm538, %v388, %v602
    %v667 = vsel %vm539, %v390, %v603
    %v668 = vsel %vm540, %v393, %v604
    %v669 = vsel %vm541, %v395, %v605
    %v670 = vsel %vm542, %v398, %v606
    %v671 = vsel %vm543, %v400, %v607
    %v672 = vsel %vm544, %v403, %v608
    %v673 = vsel %vm545, %v405, %v609
    %v674 = vsel %vm546, %v408, %v610
    %v675 = vsel %vm547, %v410, %v611
    %v676 = vsel %vm548, %v413, %v612
    %v677 = vsel %vm549, %v415, %v613
    %v678 = vsel %vm550, %v418, %v614
    %v679 = vsel %vm551, %v420, %v615
    %v680 = vsel %vm552, %v423, %v616
    %v681 = vsel %vm553, %v425, %v617
    %v682 = vsel %vm554, %v428, %v618
    %v683 = vsel %vm555, %v430, %v619
    %v684 = vsel %vm556, %v433, %v620
    %v685 = vsel %vm557, %v435, %v621
    %v686 = vsel %vm558, %v438, %v622
    %v687 = vsel %vm559, %v440, %v623
    %v688 = vsel %vm560, %v443, %v624
    %v689 = vsel %vm561, %v445, %v625
    %v690 = vsel %vm562, %v448, %v626
    %v691 = vsel %vm563, %v450, %v627
    %v692 = vsel %vm564, %v453, %v628
    %v693 = vsel %vm565, %v455, %v629
    %v694 = vsel %vm566, %v458, %v630
    %v695 = vsel %vm567, %v460, %v631
    %v696 = vsel %vm568, %v463, %v632
    %v697 = vsel %vm569, %v465, %v633
    %v698 = vsel %vm570, %v468, %v634
    %v699 = vsel %vm571, %v470, %v635
    %v700 = vsel %vm572, %v473, %v636
    %v701 = vsel %vm573, %v475, %v637
    %v702 = vsel %vm574, %v478, %v638
    %v703 = vsel %vm575, %v480, %v639
    %v704 = vsel %vm576, %v483, %v640
    %v705 = vsel %vm577, %v485, %v641
    %v706 = vsel %vm578, %v488, %v642
    %v707 = vsel %vm579, %v490, %v643
    %v708 = vsel %vm580, %v493, %v644
    %v709 = vsel %vm581, %v495, %v645
    %v710 = vsel %vm582, %v498, %v646
    %v711 = vsel %vm583, %v500, %v647
    %v712 = vsel %vm584, %v503, %v648
    %v713 = vsel %vm585, %v505, %v649
    %v714 = vsel %vm586, %v508, %v650
    %v715 = vsel %vm587, %v510, %v651
    %v716 = vsel %vm588, %v513, %v652
    %v717 = vsel %vm589, %v515, %v653
    %v718 = vsel %vm590, %v518, %v654
    %v719 = vsel %vm591, %v520, %v655
    %v720 = vsel %vm592, %v523, %v656
    %v721 = vsel %vm593, %v525, %v657
    %v722 = vsel %vm594, %v528, %v658
    %v723 = vsel %vm595, %v530, %v659
    %v724 = vpack.c.bf16 %v661, %v660
    %v725 = vpack.c.bf16 %v663, %v662
    %v726 = vpack.c.bf16 %v665, %v664
    %v727 = vpack.c.bf16 %v667, %v666
    %v728 = vpack.c.bf16 %v669, %v668
    %v729 = vpack.c.bf16 %v671, %v670
    %v730 = vpack.c.bf16 %v673, %v672
    %v731 = vpack.c.bf16 %v675, %v674
    %v732 = vpack.c.bf16 %v677, %v676
    %v733 = vpack.c.bf16 %v679, %v678
    %v734 = vpack.c.bf16 %v681, %v680
    %v735 = vpack.c.bf16 %v683, %v682
    %v736 = vpack.c.bf16 %v685, %v684
    %v737 = vpack.c.bf16 %v687, %v686
    %v738 = vpack.c.bf16 %v689, %v688
    %v739 = vpack.c.bf16 %v691, %v690
    %v740 = vpack.c.bf16 %v693, %v692
    %v741 = vpack.c.bf16 %v695, %v694
    %v742 = vpack.c.bf16 %v697, %v696
    %v743 = vpack.c.bf16 %v699, %v698
    %v744 = vpack.c.bf16 %v701, %v700
    %v745 = vpack.c.bf16 %v703, %v702
    %v746 = vpack.c.bf16 %v705, %v704
    %v747 = vpack.c.bf16 %v707, %v706
    %v748 = vpack.c.bf16 %v709, %v708
    %v749 = vpack.c.bf16 %v711, %v710
    %v750 = vpack.c.bf16 %v713, %v712
    %v751 = vpack.c.bf16 %v715, %v714
    %v752 = vpack.c.bf16 %v717, %v716
    %v753 = vpack.c.bf16 %v719, %v718
    %v754 = vpack.c.bf16 %v721, %v720
    %v755 = vpack.c.bf16 %v723, %v722
    %v756 = vld [vmem:[%s3] sm:$0xff]
    %v757 = vld [vmem:[%s3 + $0x8] sm:$0xff]
    %v758 = vld [vmem:[%s3 + $0x10] sm:$0xff]
    %v759 = vld [vmem:[%s3 + $0x18] sm:$0xff]
    %v760 = vld [vmem:[%s3 + $0x20] sm:$0xff]
    %v761 = vld [vmem:[%s3 + $0x28] sm:$0xff]
    %v762 = vld [vmem:[%s3 + $0x30] sm:$0xff]
    %v763 = vld [vmem:[%s3 + $0x38] sm:$0xff]
    %v764 = vld [vmem:[%s3 + $0x40] sm:$0xff]
    %v765 = vld [vmem:[%s3 + $0x48] sm:$0xff]
    %v766 = vld [vmem:[%s3 + $0x50] sm:$0xff]
    %v767 = vld [vmem:[%s3 + $0x58] sm:$0xff]
    %v768 = vld [vmem:[%s3 + $0x60] sm:$0xff]
    %v769 = vld [vmem:[%s3 + $0x68] sm:$0xff]
    %v770 = vld [vmem:[%s3 + $0x70] sm:$0xff]
    %v771 = vld [vmem:[%s3 + $0x78] sm:$0xff]
    %v772 = vld [vmem:[%s4] sm:$0x3]
    %v774 = vperm.slane %v772, 0
    %v775 = vperm.slane %v772, 1
    %v794 = vunpack.c.l.b16 %v756
    %v795 = vunpack.c.h.b16 %v756
    %v796 = vunpack.c.l.b16 %v757
    %v797 = vunpack.c.h.b16 %v757
    %v798 = vunpack.c.l.b16 %v758
    %v799 = vunpack.c.h.b16 %v758
    %v800 = vunpack.c.l.b16 %v759
    %v801 = vunpack.c.h.b16 %v759
    %v802 = vunpack.c.l.b16 %v760
    %v803 = vunpack.c.h.b16 %v760
    %v804 = vunpack.c.l.b16 %v761
    %v805 = vunpack.c.h.b16 %v761
    %v806 = vunpack.c.l.b16 %v762
    %v807 = vunpack.c.h.b16 %v762
    %v808 = vunpack.c.l.b16 %v763
    %v809 = vunpack.c.h.b16 %v763
    %v810 = vunpack.c.l.b16 %v764
    %v811 = vunpack.c.h.b16 %v764
    %v812 = vunpack.c.l.b16 %v765
    %v813 = vunpack.c.h.b16 %v765
    %v814 = vunpack.c.l.b16 %v766
    %v815 = vunpack.c.h.b16 %v766
    %v816 = vunpack.c.l.b16 %v767
    %v817 = vunpack.c.h.b16 %v767
    %v818 = vunpack.c.l.b16 %v768
    %v819 = vunpack.c.h.b16 %v768
    %v820 = vunpack.c.l.b16 %v769
    %v821 = vunpack.c.h.b16 %v769
    %v822 = vunpack.c.l.b16 %v770
    %v823 = vunpack.c.h.b16 %v770
    %v824 = vunpack.c.l.b16 %v771
    %v825 = vunpack.c.h.b16 %v771
    %v826 = vpack.c.b16 %v796, %v794
    %v827 = vpack.c.b16 %v797, %v795
    %v828 = vpack.c.b16 %v800, %v798
    %v829 = vpack.c.b16 %v801, %v799
    %v830 = vpack.c.b16 %v804, %v802
    %v831 = vpack.c.b16 %v805, %v803
    %v832 = vpack.c.b16 %v808, %v806
    %v833 = vpack.c.b16 %v809, %v807
    %v834 = vpack.c.b16 %v812, %v810
    %v835 = vpack.c.b16 %v813, %v811
    %v836 = vpack.c.b16 %v816, %v814
    %v837 = vpack.c.b16 %v817, %v815
    %v838 = vpack.c.b16 %v820, %v818
    %v839 = vpack.c.b16 %v821, %v819
    %v840 = vpack.c.b16 %v824, %v822
    %v841 = vpack.c.b16 %v825, %v823
    %858 = vmatpush.bf16.msra.mxu0 %v840
    %859 = vmatpush.bf16.msra.mxu0 %v838
    %860 = vmatpush.bf16.msra.mxu0 %v836
    %861 = vmatpush.bf16.msra.mxu0 %v834
    %862 = vmatpush.bf16.msra.mxu0 %v832
    %863 = vmatpush.bf16.msra.mxu0 %v830
    %864 = vmatpush.bf16.msra.mxu0 %v828
    %865 = vmatpush.bf16.msra.mxu0 %v826
    %866 = vmatmul.bf16.gmra.mxu0 %v724
    %v867 = vpop.f32.mrf.mxu0
    %v868 = vadd.f32 %v774, %v867
    %v869 = vpop.f32.mrf.mxu0
    %v870 = vadd.f32 %v774, %v869
    %871 = vmatmul.bf16.gmra.mxu0 %v725
    %v872 = vpop.f32.mrf.mxu0
    %v873 = vadd.f32 %v774, %v872
    %v874 = vpop.f32.mrf.mxu0
    %v875 = vadd.f32 %v774, %v874
    %876 = vmatmul.bf16.gmra.mxu0 %v726
    %v877 = vpop.f32.mrf.mxu0
    %v878 = vadd.f32 %v774, %v877
    %v879 = vpop.f32.mrf.mxu0
    %v880 = vadd.f32 %v774, %v879
    %881 = vmatmul.bf16.gmra.mxu0 %v727
    %v882 = vpop.f32.mrf.mxu0
    %v883 = vadd.f32 %v774, %v882
    %v884 = vpop.f32.mrf.mxu0
    %v885 = vadd.f32 %v774, %v884
    %886 = vmatmul.bf16.gmra.mxu0 %v728
    %v887 = vpop.f32.mrf.mxu0
    %v888 = vadd.f32 %v774, %v887
    %v889 = vpop.f32.mrf.mxu0
    %v890 = vadd.f32 %v774, %v889
    %891 = vmatmul.bf16.gmra.mxu0 %v729
    %v892 = vpop.f32.mrf.mxu0
    %v893 = vadd.f32 %v774, %v892
    %v894 = vpop.f32.mrf.mxu0
    %v895 = vadd.f32 %v774, %v894
    %896 = vmatmul.bf16.gmra.mxu0 %v730
    %v897 = vpop.f32.mrf.mxu0
    %v898 = vadd.f32 %v774, %v897
    %v899 = vpop.f32.mrf.mxu0
    %v900 = vadd.f32 %v774, %v899
    %901 = vmatmul.bf16.gmra.mxu0 %v731
    %v902 = vpop.f32.mrf.mxu0
    %v903 = vadd.f32 %v774, %v902
    %v904 = vpop.f32.mrf.mxu0
    %v905 = vadd.f32 %v774, %v904
    %906 = vmatmul.bf16.gmra.mxu0 %v732
    %v907 = vpop.f32.mrf.mxu0
    %v908 = vadd.f32 %v774, %v907
    %v909 = vpop.f32.mrf.mxu0
    %v910 = vadd.f32 %v774, %v909
    %911 = vmatmul.bf16.gmra.mxu0 %v733
    %v912 = vpop.f32.mrf.mxu0
    %v913 = vadd.f32 %v774, %v912
    %v914 = vpop.f32.mrf.mxu0
    %v915 = vadd.f32 %v774, %v914
    %916 = vmatmul.bf16.gmra.mxu0 %v734
    %v917 = vpop.f32.mrf.mxu0
    %v918 = vadd.f32 %v774, %v917
    %v919 = vpop.f32.mrf.mxu0
    %v920 = vadd.f32 %v774, %v919
    %921 = vmatmul.bf16.gmra.mxu0 %v735
    %v922 = vpop.f32.mrf.mxu0
    %v923 = vadd.f32 %v774, %v922
    %v924 = vpop.f32.mrf.mxu0
    %v925 = vadd.f32 %v774, %v924
    %926 = vmatmul.bf16.gmra.mxu0 %v736
    %v927 = vpop.f32.mrf.mxu0
    %v928 = vadd.f32 %v774, %v927
    %v929 = vpop.f32.mrf.mxu0
    %v930 = vadd.f32 %v774, %v929
    %931 = vmatmul.bf16.gmra.mxu0 %v737
    %v932 = vpop.f32.mrf.mxu0
    %v933 = vadd.f32 %v774, %v932
    %v934 = vpop.f32.mrf.mxu0
    %v935 = vadd.f32 %v774, %v934
    %936 = vmatmul.bf16.gmra.mxu0 %v738
    %v937 = vpop.f32.mrf.mxu0
    %v938 = vadd.f32 %v774, %v937
    %v939 = vpop.f32.mrf.mxu0
    %v940 = vadd.f32 %v774, %v939
    %941 = vmatmul.bf16.gmra.mxu0 %v739
    %v942 = vpop.f32.mrf.mxu0
    %v943 = vadd.f32 %v774, %v942
    %v944 = vpop.f32.mrf.mxu0
    %v945 = vadd.f32 %v774, %v944
    %946 = vmatmul.bf16.gmra.mxu0 %v740
    %v947 = vpop.f32.mrf.mxu0
    %v948 = vadd.f32 %v774, %v947
    %v949 = vpop.f32.mrf.mxu0
    %v950 = vadd.f32 %v774, %v949
    %951 = vmatmul.bf16.gmra.mxu0 %v741
    %v952 = vpop.f32.mrf.mxu0
    %v953 = vadd.f32 %v774, %v952
    %v954 = vpop.f32.mrf.mxu0
    %v955 = vadd.f32 %v774, %v954
    %956 = vmatmul.bf16.gmra.mxu0 %v742
    %v957 = vpop.f32.mrf.mxu0
    %v958 = vadd.f32 %v774, %v957
    %v959 = vpop.f32.mrf.mxu0
    %v960 = vadd.f32 %v774, %v959
    %961 = vmatmul.bf16.gmra.mxu0 %v743
    %v962 = vpop.f32.mrf.mxu0
    %v963 = vadd.f32 %v774, %v962
    %v964 = vpop.f32.mrf.mxu0
    %v965 = vadd.f32 %v774, %v964
    %966 = vmatmul.bf16.gmra.mxu0 %v744
    %v967 = vpop.f32.mrf.mxu0
    %v968 = vadd.f32 %v774, %v967
    %v969 = vpop.f32.mrf.mxu0
    %v970 = vadd.f32 %v774, %v969
    %971 = vmatmul.bf16.gmra.mxu0 %v745
    %v972 = vpop.f32.mrf.mxu0
    %v973 = vadd.f32 %v774, %v972
    %v974 = vpop.f32.mrf.mxu0
    %v975 = vadd.f32 %v774, %v974
    %976 = vmatmul.bf16.gmra.mxu0 %v746
    %v977 = vpop.f32.mrf.mxu0
    %v978 = vadd.f32 %v774, %v977
    %v979 = vpop.f32.mrf.mxu0
    %v980 = vadd.f32 %v774, %v979
    %981 = vmatmul.bf16.gmra.mxu0 %v747
    %v982 = vpop.f32.mrf.mxu0
    %v983 = vadd.f32 %v774, %v982
    %v984 = vpop.f32.mrf.mxu0
    %v985 = vadd.f32 %v774, %v984
    %986 = vmatmul.bf16.gmra.mxu0 %v748
    %v987 = vpop.f32.mrf.mxu0
    %v988 = vadd.f32 %v774, %v987
    %v989 = vpop.f32.mrf.mxu0
    %v990 = vadd.f32 %v774, %v989
    %991 = vmatmul.bf16.gmra.mxu0 %v749
    %v992 = vpop.f32.mrf.mxu0
    %v993 = vadd.f32 %v774, %v992
    %v994 = vpop.f32.mrf.mxu0
    %v995 = vadd.f32 %v774, %v994
    %996 = vmatmul.bf16.gmra.mxu0 %v750
    %v997 = vpop.f32.mrf.mxu0
    %v998 = vadd.f32 %v774, %v997
    %v999 = vpop.f32.mrf.mxu0
    %v1000 = vadd.f32 %v774, %v999
    %1001 = vmatmul.bf16.gmra.mxu0 %v751
    %v1002 = vpop.f32.mrf.mxu0
    %v1003 = vadd.f32 %v774, %v1002
    %v1004 = vpop.f32.mrf.mxu0
    %v1005 = vadd.f32 %v774, %v1004
    %1006 = vmatmul.bf16.gmra.mxu0 %v752
    %v1007 = vpop.f32.mrf.mxu0
    %v1008 = vadd.f32 %v774, %v1007
    %v1009 = vpop.f32.mrf.mxu0
    %v1010 = vadd.f32 %v774, %v1009
    %1011 = vmatmul.bf16.gmra.mxu0 %v753
    %v1012 = vpop.f32.mrf.mxu0
    %v1013 = vadd.f32 %v774, %v1012
    %v1014 = vpop.f32.mrf.mxu0
    %v1015 = vadd.f32 %v774, %v1014
    %1016 = vmatmul.bf16.gmra.mxu0 %v754
    %v1017 = vpop.f32.mrf.mxu0
    %v1018 = vadd.f32 %v774, %v1017
    %v1019 = vpop.f32.mrf.mxu0
    %v1020 = vadd.f32 %v774, %v1019
    %1021 = vmatmul.bf16.gmra.mxu0 %v755
    %v1022 = vpop.f32.mrf.mxu0
    %v1023 = vadd.f32 %v774, %v1022
    %v1024 = vpop.f32.mrf.mxu0
    %v1025 = vadd.f32 %v774, %v1024
    %1026 = vdwg.mxu0
    %1027 = vmatpush.bf16.msra.mxu0 %v841
    %1028 = vmatpush.bf16.msra.mxu0 %v839
    %1029 = vmatpush.bf16.msra.mxu0 %v837
    %1030 = vmatpush.bf16.msra.mxu0 %v835
    %1031 = vmatpush.bf16.msra.mxu0 %v833
    %1032 = vmatpush.bf16.msra.mxu0 %v831
    %1033 = vmatpush.bf16.msra.mxu0 %v829
    %1034 = vmatpush.bf16.msra.mxu0 %v827
    %1035 = vmatmul.bf16.gmra.mxu0 %v724
    %v1036 = vpop.f32.mrf.mxu0
    %v1037 = vadd.f32 %v775, %v1036
    %v1038 = vpop.f32.mrf.mxu0
    %v1039 = vadd.f32 %v775, %v1038
    %1040 = vmatmul.bf16.gmra.mxu0 %v725
    %v1041 = vpop.f32.mrf.mxu0
    %v1042 = vadd.f32 %v775, %v1041
    %v1043 = vpop.f32.mrf.mxu0
    %v1044 = vadd.f32 %v775, %v1043
    %1045 = vmatmul.bf16.gmra.mxu0 %v726
    %v1046 = vpop.f32.mrf.mxu0
    %v1047 = vadd.f32 %v775, %v1046
    %v1048 = vpop.f32.mrf.mxu0
    %v1049 = vadd.f32 %v775, %v1048
    %1050 = vmatmul.bf16.gmra.mxu0 %v727
    %v1051 = vpop.f32.mrf.mxu0
    %v1052 = vadd.f32 %v775, %v1051
    %v1053 = vpop.f32.mrf.mxu0
    %v1054 = vadd.f32 %v775, %v1053
    %1055 = vmatmul.bf16.gmra.mxu0 %v728
    %v1056 = vpop.f32.mrf.mxu0
    %v1057 = vadd.f32 %v775, %v1056
    %v1058 = vpop.f32.mrf.mxu0
    %v1059 = vadd.f32 %v775, %v1058
    %1060 = vmatmul.bf16.gmra.mxu0 %v729
    %v1061 = vpop.f32.mrf.mxu0
    %v1062 = vadd.f32 %v775, %v1061
    %v1063 = vpop.f32.mrf.mxu0
    %v1064 = vadd.f32 %v775, %v1063
    %1065 = vmatmul.bf16.gmra.mxu0 %v730
    %v1066 = vpop.f32.mrf.mxu0
    %v1067 = vadd.f32 %v775, %v1066
    %v1068 = vpop.f32.mrf.mxu0
    %v1069 = vadd.f32 %v775, %v1068
    %1070 = vmatmul.bf16.gmra.mxu0 %v731
    %v1071 = vpop.f32.mrf.mxu0
    %v1072 = vadd.f32 %v775, %v1071
    %v1073 = vpop.f32.mrf.mxu0
    %v1074 = vadd.f32 %v775, %v1073
    %1075 = vmatmul.bf16.gmra.mxu0 %v732
    %v1076 = vpop.f32.mrf.mxu0
    %v1077 = vadd.f32 %v775, %v1076
    %v1078 = vpop.f32.mrf.mxu0
    %v1079 = vadd.f32 %v775, %v1078
    %1080 = vmatmul.bf16.gmra.mxu0 %v733
    %v1081 = vpop.f32.mrf.mxu0
    %v1082 = vadd.f32 %v775, %v1081
    %v1083 = vpop.f32.mrf.mxu0
    %v1084 = vadd.f32 %v775, %v1083
    %1085 = vmatmul.bf16.gmra.mxu0 %v734
    %v1086 = vpop.f32.mrf.mxu0
    %v1087 = vadd.f32 %v775, %v1086
    %v1088 = vpop.f32.mrf.mxu0
    %v1089 = vadd.f32 %v775, %v1088
    %1090 = vmatmul.bf16.gmra.mxu0 %v735
    %v1091 = vpop.f32.mrf.mxu0
    %v1092 = vadd.f32 %v775, %v1091
    %v1093 = vpop.f32.mrf.mxu0
    %v1094 = vadd.f32 %v775, %v1093
    %1095 = vmatmul.bf16.gmra.mxu0 %v736
    %v1096 = vpop.f32.mrf.mxu0
    %v1097 = vadd.f32 %v775, %v1096
    %v1098 = vpop.f32.mrf.mxu0
    %v1099 = vadd.f32 %v775, %v1098
    %1100 = vmatmul.bf16.gmra.mxu0 %v737
    %v1101 = vpop.f32.mrf.mxu0
    %v1102 = vadd.f32 %v775, %v1101
    %v1103 = vpop.f32.mrf.mxu0
    %v1104 = vadd.f32 %v775, %v1103
    %1105 = vmatmul.bf16.gmra.mxu0 %v738
    %v1106 = vpop.f32.mrf.mxu0
    %v1107 = vadd.f32 %v775, %v1106
    %v1108 = vpop.f32.mrf.mxu0
    %v1109 = vadd.f32 %v775, %v1108
    %1110 = vmatmul.bf16.gmra.mxu0 %v739
    %v1111 = vpop.f32.mrf.mxu0
    %v1112 = vadd.f32 %v775, %v1111
    %v1113 = vpop.f32.mrf.mxu0
    %v1114 = vadd.f32 %v775, %v1113
    %1115 = vmatmul.bf16.gmra.mxu0 %v740
    %v1116 = vpop.f32.mrf.mxu0
    %v1117 = vadd.f32 %v775, %v1116
    %v1118 = vpop.f32.mrf.mxu0
    %v1119 = vadd.f32 %v775, %v1118
    %1120 = vmatmul.bf16.gmra.mxu0 %v741
    %v1121 = vpop.f32.mrf.mxu0
    %v1122 = vadd.f32 %v775, %v1121
    %v1123 = vpop.f32.mrf.mxu0
    %v1124 = vadd.f32 %v775, %v1123
    %1125 = vmatmul.bf16.gmra.mxu0 %v742
    %v1126 = vpop.f32.mrf.mxu0
    %v1127 = vadd.f32 %v775, %v1126
    %v1128 = vpop.f32.mrf.mxu0
    %v1129 = vadd.f32 %v775, %v1128
    %1130 = vmatmul.bf16.gmra.mxu0 %v743
    %v1131 = vpop.f32.mrf.mxu0
    %v1132 = vadd.f32 %v775, %v1131
    %v1133 = vpop.f32.mrf.mxu0
    %v1134 = vadd.f32 %v775, %v1133
    %1135 = vmatmul.bf16.gmra.mxu0 %v744
    %v1136 = vpop.f32.mrf.mxu0
    %v1137 = vadd.f32 %v775, %v1136
    %v1138 = vpop.f32.mrf.mxu0
    %v1139 = vadd.f32 %v775, %v1138
    %1140 = vmatmul.bf16.gmra.mxu0 %v745
    %v1141 = vpop.f32.mrf.mxu0
    %v1142 = vadd.f32 %v775, %v1141
    %v1143 = vpop.f32.mrf.mxu0
    %v1144 = vadd.f32 %v775, %v1143
    %1145 = vmatmul.bf16.gmra.mxu0 %v746
    %v1146 = vpop.f32.mrf.mxu0
    %v1147 = vadd.f32 %v775, %v1146
    %v1148 = vpop.f32.mrf.mxu0
    %v1149 = vadd.f32 %v775, %v1148
    %1150 = vmatmul.bf16.gmra.mxu0 %v747
    %v1151 = vpop.f32.mrf.mxu0
    %v1152 = vadd.f32 %v775, %v1151
    %v1153 = vpop.f32.mrf.mxu0
    %v1154 = vadd.f32 %v775, %v1153
    %1155 = vmatmul.bf16.gmra.mxu0 %v748
    %v1156 = vpop.f32.mrf.mxu0
    %v1157 = vadd.f32 %v775, %v1156
    %v1158 = vpop.f32.mrf.mxu0
    %v1159 = vadd.f32 %v775, %v1158
    %1160 = vmatmul.bf16.gmra.mxu0 %v749
    %v1161 = vpop.f32.mrf.mxu0
    %v1162 = vadd.f32 %v775, %v1161
    %v1163 = vpop.f32.mrf.mxu0
    %v1164 = vadd.f32 %v775, %v1163
    %1165 = vmatmul.bf16.gmra.mxu0 %v750
    %v1166 = vpop.f32.mrf.mxu0
    %v1167 = vadd.f32 %v775, %v1166
    %v1168 = vpop.f32.mrf.mxu0
    %v1169 = vadd.f32 %v775, %v1168
    %1170 = vmatmul.bf16.gmra.mxu0 %v751
    %v1171 = vpop.f32.mrf.mxu0
    %v1172 = vadd.f32 %v775, %v1171
    %v1173 = vpop.f32.mrf.mxu0
    %v1174 = vadd.f32 %v775, %v1173
    %1175 = vmatmul.bf16.gmra.mxu0 %v752
    %v1176 = vpop.f32.mrf.mxu0
    %v1177 = vadd.f32 %v775, %v1176
    %v1178 = vpop.f32.mrf.mxu0
    %v1179 = vadd.f32 %v775, %v1178
    %1180 = vmatmul.bf16.gmra.mxu0 %v753
    %v1181 = vpop.f32.mrf.mxu0
    %v1182 = vadd.f32 %v775, %v1181
    %v1183 = vpop.f32.mrf.mxu0
    %v1184 = vadd.f32 %v775, %v1183
    %1185 = vmatmul.bf16.gmra.mxu0 %v754
    %v1186 = vpop.f32.mrf.mxu0
    %v1187 = vadd.f32 %v775, %v1186
    %v1188 = vpop.f32.mrf.mxu0
    %v1189 = vadd.f32 %v775, %v1188
    %1190 = vmatmul.bf16.gmra.mxu0 %v755
    %v1191 = vpop.f32.mrf.mxu0
    %v1192 = vadd.f32 %v775, %v1191
    %v1193 = vpop.f32.mrf.mxu0
    %v1194 = vadd.f32 %v775, %v1193
    %1195 = vdwg.mxu0
    %1196 = vst [vmem:[#allocation2] sm:$0xff] %v868
    %1197 = vst [vmem:[#allocation2 + $0x8] sm:$0xff] %v1037
    %1198 = vst [vmem:[#allocation2 + $0x10] sm:$0xff] %v870
    %1199 = vst [vmem:[#allocation2 + $0x18] sm:$0xff] %v1039
    %1200 = vst [vmem:[#allocation2 + $0x20] sm:$0xff] %v873
    %1201 = vst [vmem:[#allocation2 + $0x28] sm:$0xff] %v1042
    %1202 = vst [vmem:[#allocation2 + $0x30] sm:$0xff] %v875
    %1203 = vst [vmem:[#allocation2 + $0x38] sm:$0xff] %v1044
    %1204 = vst [vmem:[#allocation2 + $0x40] sm:$0xff] %v878
    %1205 = vst [vmem:[#allocation2 + $0x48] sm:$0xff] %v1047
    %1206 = vst [vmem:[#allocation2 + $0x50] sm:$0xff] %v880
    %1207 = vst [vmem:[#allocation2 + $0x58] sm:$0xff] %v1049
    %1208 = vst [vmem:[#allocation2 + $0x60] sm:$0xff] %v883
    %1209 = vst [vmem:[#allocation2 + $0x68] sm:$0xff] %v1052
    %1210 = vst [vmem:[#allocation2 + $0x70] sm:$0xff] %v885
    %1211 = vst [vmem:[#allocation2 + $0x78] sm:$0xff] %v1054
    %1212 = vst [vmem:[#allocation2 + $0x80] sm:$0xff] %v888
    %1213 = vst [vmem:[#allocation2 + $0x88] sm:$0xff] %v1057
    %1214 = vst [vmem:[#allocation2 + $0x90] sm:$0xff] %v890
    %1215 = vst [vmem:[#allocation2 + $0x98] sm:$0xff] %v1059
    %1216 = vst [vmem:[#allocation2 + $0xa0] sm:$0xff] %v893
    %1217 = vst [vmem:[#allocation2 + $0xa8] sm:$0xff] %v1062
    %1218 = vst [vmem:[#allocation2 + $0xb0] sm:$0xff] %v895
    %1219 = vst [vmem:[#allocation2 + $0xb8] sm:$0xff] %v1064
    %1220 = vst [vmem:[#allocation2 + $0xc0] sm:$0xff] %v898
    %1221 = vst [vmem:[#allocation2 + $0xc8] sm:$0xff] %v1067
    %1222 = vst [vmem:[#allocation2 + $0xd0] sm:$0xff] %v900
    %1223 = vst [vmem:[#allocation2 + $0xd8] sm:$0xff] %v1069
    %1224 = vst [vmem:[#allocation2 + $0xe0] sm:$0xff] %v903
    %1225 = vst [vmem:[#allocation2 + $0xe8] sm:$0xff] %v1072
    %1226 = vst [vmem:[#allocation2 + $0xf0] sm:$0xff] %v905
    %1227 = vst [vmem:[#allocation2 + $0xf8] sm:$0xff] %v1074
    %1228 = vst [vmem:[#allocation2 + $0x100] sm:$0xff] %v908
    %1229 = vst [vmem:[#allocation2 + $0x108] sm:$0xff] %v1077
    %1230 = vst [vmem:[#allocation2 + $0x110] sm:$0xff] %v910
    %1231 = vst [vmem:[#allocation2 + $0x118] sm:$0xff] %v1079
    %1232 = vst [vmem:[#allocation2 + $0x120] sm:$0xff] %v913
    %1233 = vst [vmem:[#allocation2 + $0x128] sm:$0xff] %v1082
    %1234 = vst [vmem:[#allocation2 + $0x130] sm:$0xff] %v915
    %1235 = vst [vmem:[#allocation2 + $0x138] sm:$0xff] %v1084
    %1236 = vst [vmem:[#allocation2 + $0x140] sm:$0xff] %v918
    %1237 = vst [vmem:[#allocation2 + $0x148] sm:$0xff] %v1087
    %1238 = vst [vmem:[#allocation2 + $0x150] sm:$0xff] %v920
    %1239 = vst [vmem:[#allocation2 + $0x158] sm:$0xff] %v1089
    %1240 = vst [vmem:[#allocation2 + $0x160] sm:$0xff] %v923
    %1241 = vst [vmem:[#allocation2 + $0x168] sm:$0xff] %v1092
    %1242 = vst [vmem:[#allocation2 + $0x170] sm:$0xff] %v925
    %1243 = vst [vmem:[#allocation2 + $0x178] sm:$0xff] %v1094
    %1244 = vst [vmem:[#allocation2 + $0x180] sm:$0xff] %v928
    %1245 = vst [vmem:[#allocation2 + $0x188] sm:$0xff] %v1097
    %1246 = vst [vmem:[#allocation2 + $0x190] sm:$0xff] %v930
    %1247 = vst [vmem:[#allocation2 + $0x198] sm:$0xff] %v1099
    %1248 = vst [vmem:[#allocation2 + $0x1a0] sm:$0xff] %v933
    %1249 = vst [vmem:[#allocation2 + $0x1a8] sm:$0xff] %v1102
    %1250 = vst [vmem:[#allocation2 + $0x1b0] sm:$0xff] %v935
    %1251 = vst [vmem:[#allocation2 + $0x1b8] sm:$0xff] %v1104
    %1252 = vst [vmem:[#allocation2 + $0x1c0] sm:$0xff] %v938
    %1253 = vst [vmem:[#allocation2 + $0x1c8] sm:$0xff] %v1107
    %1254 = vst [vmem:[#allocation2 + $0x1d0] sm:$0xff] %v940
    %1255 = vst [vmem:[#allocation2 + $0x1d8] sm:$0xff] %v1109
    %1256 = vst [vmem:[#allocation2 + $0x1e0] sm:$0xff] %v943
    %1257 = vst [vmem:[#allocation2 + $0x1e8] sm:$0xff] %v1112
    %1258 = vst [vmem:[#allocation2 + $0x1f0] sm:$0xff] %v945
    %1259 = vst [vmem:[#allocation2 + $0x1f8] sm:$0xff] %v1114
    %1260 = vst [vmem:[#allocation2 + $0x200] sm:$0xff] %v948
    %1261 = vst [vmem:[#allocation2 + $0x208] sm:$0xff] %v1117
    %1262 = vst [vmem:[#allocation2 + $0x210] sm:$0xff] %v950
    %1263 = vst [vmem:[#allocation2 + $0x218] sm:$0xff] %v1119
    %1264 = vst [vmem:[#allocation2 + $0x220] sm:$0xff] %v953
    %1265 = vst [vmem:[#allocation2 + $0x228] sm:$0xff] %v1122
    %1266 = vst [vmem:[#allocation2 + $0x230] sm:$0xff] %v955
    %1267 = vst [vmem:[#allocation2 + $0x238] sm:$0xff] %v1124
    %1268 = vst [vmem:[#allocation2 + $0x240] sm:$0xff] %v958
    %1269 = vst [vmem:[#allocation2 + $0x248] sm:$0xff] %v1127
    %1270 = vst [vmem:[#allocation2 + $0x250] sm:$0xff] %v960
    %1271 = vst [vmem:[#allocation2 + $0x258] sm:$0xff] %v1129
    %1272 = vst [vmem:[#allocation2 + $0x260] sm:$0xff] %v963
    %1273 = vst [vmem:[#allocation2 + $0x268] sm:$0xff] %v1132
    %1274 = vst [vmem:[#allocation2 + $0x270] sm:$0xff] %v965
    %1275 = vst [vmem:[#allocation2 + $0x278] sm:$0xff] %v1134
    %1276 = vst [vmem:[#allocation2 + $0x280] sm:$0xff] %v968
    %1277 = vst [vmem:[#allocation2 + $0x288] sm:$0xff] %v1137
    %1278 = vst [vmem:[#allocation2 + $0x290] sm:$0xff] %v970
    %1279 = vst [vmem:[#allocation2 + $0x298] sm:$0xff] %v1139
    %1280 = vst [vmem:[#allocation2 + $0x2a0] sm:$0xff] %v973
    %1281 = vst [vmem:[#allocation2 + $0x2a8] sm:$0xff] %v1142
    %1282 = vst [vmem:[#allocation2 + $0x2b0] sm:$0xff] %v975
    %1283 = vst [vmem:[#allocation2 + $0x2b8] sm:$0xff] %v1144
    %1284 = vst [vmem:[#allocation2 + $0x2c0] sm:$0xff] %v978
    %1285 = vst [vmem:[#allocation2 + $0x2c8] sm:$0xff] %v1147
    %1286 = vst [vmem:[#allocation2 + $0x2d0] sm:$0xff] %v980
    %1287 = vst [vmem:[#allocation2 + $0x2d8] sm:$0xff] %v1149
    %1288 = vst [vmem:[#allocation2 + $0x2e0] sm:$0xff] %v983
    %1289 = vst [vmem:[#allocation2 + $0x2e8] sm:$0xff] %v1152
    %1290 = vst [vmem:[#allocation2 + $0x2f0] sm:$0xff] %v985
    %1291 = vst [vmem:[#allocation2 + $0x2f8] sm:$0xff] %v1154
    %1292 = vst [vmem:[#allocation2 + $0x300] sm:$0xff] %v988
    %1293 = vst [vmem:[#allocation2 + $0x308] sm:$0xff] %v1157
    %1294 = vst [vmem:[#allocation2 + $0x310] sm:$0xff] %v990
    %1295 = vst [vmem:[#allocation2 + $0x318] sm:$0xff] %v1159
    %1296 = vst [vmem:[#allocation2 + $0x320] sm:$0xff] %v993
    %1297 = vst [vmem:[#allocation2 + $0x328] sm:$0xff] %v1162
    %1298 = vst [vmem:[#allocation2 + $0x330] sm:$0xff] %v995
    %1299 = vst [vmem:[#allocation2 + $0x338] sm:$0xff] %v1164
    %1300 = vst [vmem:[#allocation2 + $0x340] sm:$0xff] %v998
    %1301 = vst [vmem:[#allocation2 + $0x348] sm:$0xff] %v1167
    %1302 = vst [vmem:[#allocation2 + $0x350] sm:$0xff] %v1000
    %1303 = vst [vmem:[#allocation2 + $0x358] sm:$0xff] %v1169
    %1304 = vst [vmem:[#allocation2 + $0x360] sm:$0xff] %v1003
    %1305 = vst [vmem:[#allocation2 + $0x368] sm:$0xff] %v1172
    %1306 = vst [vmem:[#allocation2 + $0x370] sm:$0xff] %v1005
    %1307 = vst [vmem:[#allocation2 + $0x378] sm:$0xff] %v1174
    %1308 = vst [vmem:[#allocation2 + $0x380] sm:$0xff] %v1008
    %1309 = vst [vmem:[#allocation2 + $0x388] sm:$0xff] %v1177
    %1310 = vst [vmem:[#allocation2 + $0x390] sm:$0xff] %v1010
    %1311 = vst [vmem:[#allocation2 + $0x398] sm:$0xff] %v1179
    %1312 = vst [vmem:[#allocation2 + $0x3a0] sm:$0xff] %v1013
    %1313 = vst [vmem:[#allocation2 + $0x3a8] sm:$0xff] %v1182
    %1314 = vst [vmem:[#allocation2 + $0x3b0] sm:$0xff] %v1015
    %1315 = vst [vmem:[#allocation2 + $0x3b8] sm:$0xff] %v1184
    %1316 = vst [vmem:[#allocation2 + $0x3c0] sm:$0xff] %v1018
    %1317 = vst [vmem:[#allocation2 + $0x3c8] sm:$0xff] %v1187
    %1318 = vst [vmem:[#allocation2 + $0x3d0] sm:$0xff] %v1020
    %1319 = vst [vmem:[#allocation2 + $0x3d8] sm:$0xff] %v1189
    %1320 = vst [vmem:[#allocation2 + $0x3e0] sm:$0xff] %v1023
    %1321 = vst [vmem:[#allocation2 + $0x3e8] sm:$0xff] %v1192
    %1322 = vst [vmem:[#allocation2 + $0x3f0] sm:$0xff] %v1025
    %1323 = vst [vmem:[#allocation2 + $0x3f8] sm:$0xff] %v1194
    // Predicated region
    $region22: #{tpu_custom_call.1} parent=1 // pred_check
      _
    $region23: #{tpu_custom_call.1} parent=1 // pred_check_branch
      %1325 = sbr.rel (0) target = $region25
    $region24: #{tpu_custom_call.1} parent=1 // pred_region
      %1327 = vsyncadd [#allocation3], 0
      %s1328 = sshll.u32 [#allocation2], 4
      %s1329 = int_to_ptr.vmem [resolvable:$true] %s1328
      %s1330 = sshll.u32 %s5, 4
      %s1331 = int_to_ptr.hbm [resolvable:$true] %s1330
      %1336 = dma.vmem_to_hbm [thread:$0]  %s1329, 16384, %s1331, [#allocation3], 256, 256, 16
    $region25: #{tpu_custom_call.1} parent=1 // pred_fallthru
      _
    // Predicated region
    $region26: #{tpu_custom_call.1} parent=1 // pred_check
      _
    $region27: #{tpu_custom_call.1} parent=1 // pred_check_branch
      %1338 = sbr.rel (0) target = $region29
    $region28: #{tpu_custom_call.1} parent=1 // pred_region
      %1340 = dma.done [#allocation3], 16384
    $region29: #{tpu_custom_call.1} parent=1 // pred_fallthru
      _
    %1341 = vsyncpa [#allocation3], 1

</llo_original>
